<compile_context>
chip_gen: v7x
topology: tpu7x:2x2x1
jax: 0.10.0
libtpu: 0.0.40
codegen_flags: <defaults>
</compile_context>

<pallas_src>
import functools

import jax
import jax.numpy as jnp
from jax.experimental import pallas as pl
from jax.experimental.pallas import tpu as pltpu


# ----------------------------- global config --------------------------------

def _default_vmem_limit():
    """~75% of physical VMEM (96 MiB v5e/v6e, 48 MiB v7x); safe fallback if query fails."""
    try:
        cap = getattr(pltpu.get_tpu_info(), "vmem_capacity_bytes", None)
        if cap:
            return int(cap) * 3 // 4
    except Exception:
        pass
    return 48 * 1024 * 1024


_VMEM_LIMIT = _default_vmem_limit()

# Grid-invariant operands (constant index_map) are single-buffered: default
# double-buffering would allocate 2x VMEM for blocks that are never re-fetched.
_WEIGHT_MODE = pl.Buffered(1)


def _pick_tile(dim, prefs):
    """Largest preferred tile dividing `dim`, else the full dim (full-extent block)."""
    for t in prefs:
        if dim >= t and dim % t == 0:
            return t
    return dim


def _round_up(x, m):
    return ((x + m - 1) // m) * m


def _bcast_spec(shape):
    """BlockSpec for a grid-invariant (broadcast) operand on a 1-D grid, single-buffered."""
    zeros = (0,) * len(shape)
    return pl.BlockSpec(shape, lambda i: zeros, pipeline_mode=_WEIGHT_MODE)


def _ln(x, g, b, eps=1e-5):
    """LayerNorm in f32 (matches PyTorch eps=1e-5)."""
    mean = jnp.mean(x, axis=-1, keepdims=True)
    var = jnp.mean(jnp.square(x - mean), axis=-1, keepdims=True)
    return (x - mean) * jax.lax.rsqrt(var + eps) * g + b


# ------------------ M/N/K-tiled matmul (patch embedding) --------------------

def _matmul_kernel(x_ref, w_ref, o_ref):
    # f32 output block is revisited across the K axis -> accumulate directly into it.
    @pl.when(pl.program_id(2) == 0)
    def _():
        o_ref[...] = jnp.zeros_like(o_ref)

    o_ref[...] += jnp.dot(x_ref[...], w_ref[...], preferred_element_type=jnp.float32)


def matmul_f32(x, w):
    """(M,K) @ (K,N) -> f32, tiled over M/N/K, accumulating into the output block."""
    M, K = x.shape
    _, N = w.shape
    tm = _pick_tile(M, (256, 128))
    tn = _pick_tile(N, (256, 128))
    tk = _pick_tile(K, (512, 256, 128))
    return pl.pallas_call(
        _matmul_kernel,
        out_shape=jax.ShapeDtypeStruct((M, N), jnp.float32),
        grid=(M // tm, N // tn, K // tk),
        in_specs=[pl.BlockSpec((tm, tk), lambda i, j, k: (i, k)),
                  pl.BlockSpec((tk, tn), lambda i, j, k: (k, j))],
        out_specs=pl.BlockSpec((tm, tn), lambda i, j, k: (i, j)),
        compiler_params=pltpu.CompilerParams(
            dimension_semantics=("parallel", "parallel", "arbitrary"),
            vmem_limit_bytes=_VMEM_LIMIT),
    )(x, w)


# --------------- fused transformer layer (attention + MLP) ------------------

def _layer_kernel(*refs, heads, s_real, pre_ln):
    if pre_ln:
        (x_ref, lnp_g, lnp_b,
         ln1_g, ln1_b, wqkv, bqkv, wproj, bproj,
         ln2_g, ln2_b, w1, b1, w2, b2, o_ref, hbuf) = refs
    else:
        (x_ref,
         ln1_g, ln1_b, wqkv, bqkv, wproj, bproj,
         ln2_g, ln2_b, w1, b1, w2, b2, o_ref, hbuf) = refs
        lnp_g = lnp_b = None

    x = x_ref[0].astype(jnp.float32)                        # (S_pad, D) residual stream
    s_pad, D = x.shape
    Dh = D // heads

    if pre_ln:                                              # ln_pre fused into first layer
        x = _ln(x, lnp_g[...], lnp_b[...])

    # ---- attention sub-block: x + proj(MHA(LN1(x))) ----
    ln1 = _ln(x, ln1_g[...], ln1_b[...])
    qkv = jnp.dot(ln1.astype(wqkv.dtype), wqkv[...],
                  preferred_element_type=jnp.float32) + bqkv[...]      # (S_pad, 3D) f32
    q = qkv[:, 0:D]                                         # scale already folded into wqkv/bqkv
    k = qkv[:, D:2 * D]
    v = qkv[:, 2 * D:3 * D]

    if s_pad > s_real:                                      # mask padded key positions
        kidx = jax.lax.broadcasted_iota(jnp.int32, (1, s_pad), 1)
        key_bias = jnp.where(kidx < s_real, 0.0, -1e30).astype(jnp.float32)
    else:
        key_bias = None

    # Per-head softmax(qk^T)v; each head's output lands in the VMEM slab at its static
    # lane offset, so the out-projection is a single full-K matmul after the loop.
    for h in range(heads):
        sl = slice(h * Dh, (h + 1) * Dh)
        qh = q[:, sl].astype(jnp.bfloat16)
        kh = k[:, sl].astype(jnp.bfloat16)
        vh = v[:, sl].astype(jnp.bfloat16)
        s = jax.lax.dot_general(qh, kh, (((1,), (1,)), ((), ())),
                                preferred_element_type=jnp.float32)     # (S_pad, S_pad)
        if key_bias is not None:
            s = s + key_bias
        s = s - jnp.max(s, axis=-1, keepdims=True)
        p = jnp.exp(s)
        p = p * pl.reciprocal(jnp.sum(p, axis=-1, keepdims=True), approx=True)
        hbuf[:, sl] = jnp.dot(p.astype(jnp.bfloat16), vh,
                              preferred_element_type=jnp.float32)

    attn = jnp.dot(hbuf[...].astype(wproj.dtype), wproj[...],
                   preferred_element_type=jnp.float32) + bproj[...]
    x = x + attn                                            # residual add

    # ---- MLP sub-block: x + fc2(quickgelu(fc1(LN2(x)))) ----
    ln2 = _ln(x, ln2_g[...], ln2_b[...])
    h1 = jnp.dot(ln2.astype(w1.dtype), w1[...],
                 preferred_element_type=jnp.float32) + b1[...]
    h1 = h1 * jax.nn.sigmoid(1.702 * h1)                    # CLIP QuickGELU
    m = jnp.dot(h1.astype(w2.dtype), w2[...],
                preferred_element_type=jnp.float32) + b2[...]
    o_ref[0] = (x + m).astype(o_ref.dtype)                  # residual add (bf16 stream)


def transformer_layer(x, lyr, *, heads, s_real, ln_pre=None):
    """x: (B, S_pad, D) bf16 residual stream -> updated stream after one full layer."""
    B, S_pad, D = x.shape
    H = lyr["fc1_w"].shape[1]
    pre_ln = ln_pre is not None

    in_specs = [pl.BlockSpec((1, S_pad, D), lambda i: (i, 0, 0))]
    operands = [x]
    if pre_ln:
        in_specs += [_bcast_spec((1, D)), _bcast_spec((1, D))]
        operands += [ln_pre[0].reshape(1, D), ln_pre[1].reshape(1, D)]
    in_specs += [
        _bcast_spec((1, D)), _bcast_spec((1, D)),            # ln1 gamma/beta
        _bcast_spec((D, 3 * D)), _bcast_spec((1, 3 * D)),    # qkv
        _bcast_spec((D, D)), _bcast_spec((1, D)),            # out-proj
        _bcast_spec((1, D)), _bcast_spec((1, D)),            # ln2 gamma/beta
        _bcast_spec((D, H)), _bcast_spec((1, H)),            # fc1
        _bcast_spec((H, D)), _bcast_spec((1, D)),            # fc2
    ]
    operands += [
        lyr["ln1_g"].reshape(1, D), lyr["ln1_b"].reshape(1, D),
        lyr["qkv_w"], lyr["qkv_b"].reshape(1, 3 * D),
        lyr["proj_w"], lyr["proj_b"].reshape(1, D),
        lyr["ln2_g"].reshape(1, D), lyr["ln2_b"].reshape(1, D),
        lyr["fc1_w"], lyr["fc1_b"].reshape(1, H),
        lyr["fc2_w"], lyr["fc2_b"].reshape(1, D),
    ]

    kernel = functools.partial(_layer_kernel, heads=heads, s_real=s_real, pre_ln=pre_ln)
    return pl.pallas_call(
        kernel,
        out_shape=jax.ShapeDtypeStruct((B, S_pad, D), x.dtype),
        grid=(B,),
        in_specs=in_specs,
        out_specs=pl.BlockSpec((1, S_pad, D), lambda i: (i, 0, 0)),
        scratch_shapes=[pltpu.VMEM((S_pad, D), jnp.float32)],   # packed head-output slab
        compiler_params=pltpu.CompilerParams(
            dimension_semantics=("parallel",),
            vmem_limit_bytes=_VMEM_LIMIT),
    )(*operands)


# -------------- fused tail: ln_post + visual projection + fc ----------------

def _head_kernel(x_ref, g_ref, b_ref, wproj_ref, wfc_ref, bfc_ref, o_ref):
    ln = _ln(x_ref[...].astype(jnp.float32), g_ref[...], b_ref[...])
    emb = jnp.dot(ln.astype(wproj_ref.dtype), wproj_ref[...],
                  preferred_element_type=jnp.float32)                  # CLIP visual.proj
    logits = jnp.dot(emb.astype(wfc_ref.dtype), wfc_ref[...],
                     preferred_element_type=jnp.float32)
    logits = logits + bfc_ref[...].astype(jnp.float32)                 # fc (bf16 ~ .half())
    o_ref[...] = logits.astype(o_ref.dtype)


def clip_head(x, g, b, wproj, wfc, bfc, *, out_dtype=jnp.bfloat16):
    """(B, width) CLS rows -> ln_post -> @vis_proj -> @fc (lane-dense padded N)."""
    B, D = x.shape
    E = wproj.shape[1]
    N = wfc.shape[1]
    tm = _pick_tile(B, (256, 128))
    return pl.pallas_call(
        _head_kernel,
        out_shape=jax.ShapeDtypeStruct((B, N), out_dtype),
        grid=(B // tm,),
        in_specs=[
            pl.BlockSpec((tm, D), lambda i: (i, 0)),
            _bcast_spec((1, D)), _bcast_spec((1, D)),
            _bcast_spec((D, E)), _bcast_spec((E, N)), _bcast_spec((1, N)),
        ],
        out_specs=pl.BlockSpec((tm, N), lambda i: (i, 0)),
        compiler_params=pltpu.CompilerParams(
            dimension_semantics=("parallel",),
            vmem_limit_bytes=_VMEM_LIMIT),
    )(x, g.reshape(1, D), b.reshape(1, D), wproj, wfc, bfc.reshape(1, N))


# ------------------------------ parameters ----------------------------------

def init_params(key, *, C=3, image=32, patch=16, width=64, layers=2, heads=4,
                output_dim=1024, num_classes=10):
    n_patches = (image // patch) ** 2
    keys = iter(jax.random.split(key, 16 + layers * 8))

    def nrm(shape, std=0.02):
        return jax.random.normal(next(keys), shape, jnp.float32) * std

    # PyTorch conv weight layout is (O, I, kH, kW); fold to a (C*p*p, width) matrix
    # (conv1 in CLIP has bias=False).
    conv_w = nrm((width, C, patch, patch)).reshape(width, C * patch * patch).T

    # Pad classifier N up to a lane-dense multiple of 128.
    nc_pad = _round_up(num_classes, 128)
    fc_w = nrm((output_dim, num_classes))
    fc_w_pad = jnp.zeros((output_dim, nc_pad), jnp.float32).at[:, :num_classes].set(fc_w)

    scale = 1.0 / float(width // heads) ** 0.5   # folded into the q slice of qkv

    params = dict(
        patch=patch, heads=heads, width=width, num_classes=num_classes,
        conv_w=conv_w.astype(jnp.bfloat16),
        class_emb=nrm((width,)),
        pos_emb=nrm((n_patches + 1, width)),
        ln_pre_g=jnp.ones((width,), jnp.float32), ln_pre_b=jnp.zeros((width,), jnp.float32),
        ln_post_g=jnp.ones((width,), jnp.float32), ln_post_b=jnp.zeros((width,), jnp.float32),
        vis_proj=nrm((width, output_dim)).astype(jnp.bfloat16),   # CLIP visual.proj (no bias)
        fc_w_pad=fc_w_pad.astype(jnp.bfloat16),                   # nn.Linear(1024, nc).half()
        fc_b_pad=jnp.zeros((nc_pad,), jnp.bfloat16),
        layers=[],
    )
    for _ in range(layers):
        qkv_w = nrm((width, 3 * width))
        qkv_w = qkv_w.at[:, :width].multiply(scale)               # fold attention scale
        qkv_b = jnp.zeros((3 * width,), jnp.float32)
        qkv_b = qkv_b.at[:width].multiply(scale)
        params["layers"].append(dict(
            ln1_g=jnp.ones((width,), jnp.float32), ln1_b=jnp.zeros((width,), jnp.float32),
            qkv_w=qkv_w.astype(jnp.bfloat16),
            qkv_b=qkv_b,
            proj_w=nrm((width, width)).astype(jnp.bfloat16),
            proj_b=jnp.zeros((width,), jnp.float32),
            ln2_g=jnp.ones((width,), jnp.float32), ln2_b=jnp.zeros((width,), jnp.float32),
            fc1_w=nrm((width, 4 * width)).astype(jnp.bfloat16),
            fc1_b=jnp.zeros((4 * width,), jnp.float32),
            fc2_w=nrm((4 * width, width)).astype(jnp.bfloat16),
            fc2_b=jnp.zeros((width,), jnp.float32),
        ))
    return params


# ------------------------------ forward pass ---------------------------------

def clip_vision_forward(params, x):
    """x: (B, C, H, W) float32 (NCHW, as PyTorch). Returns (B, num_classes) bfloat16."""
    B, C, H, W = x.shape
    p = params["patch"]
    width = params["width"]
    heads = params["heads"]
    gh, gw = H // p, W // p

    # --- conv1 patch embedding (stride == kernel == patch): unfold + tiled matmul ---
    patches = (x.reshape(B, C, gh, p, gw, p)
                .transpose(0, 2, 4, 1, 3, 5)
                .reshape(B * gh * gw, C * p * p)).astype(jnp.bfloat16)   # (B*P, C*p*p)
    tok = matmul_f32(patches, params["conv_w"])                          # no bias in CLIP conv1
    tok = tok.reshape(B, gh * gw, width)

    # --- class token + positional embedding ---
    cls = jnp.broadcast_to(params["class_emb"], (B, 1, width))
    xt = jnp.concatenate([cls, tok], axis=1) + params["pos_emb"][None]   # (B, S, width) f32
    S = xt.shape[1]

    # Pad the sequence so score matrices / reductions are dense (mult of 128 for real CLIP
    # lengths, mult of 8 here); padded key positions get -inf masking inside the kernel.
    S_pad = _round_up(S, 128) if S > 128 else _round_up(S, 8)
    if S_pad != S:
        xt = jnp.pad(xt, ((0, 0), (0, S_pad - S), (0, 0)))

    # bf16 residual stream between layers (LN/residual math stays f32 inside kernels).
    h = xt.astype(jnp.bfloat16)

    # --- transformer: one fused pallas_call per layer; ln_pre fused into layer 0 ---
    assert len(params["layers"]) >= 1
    for li, lyr in enumerate(params["layers"]):
        ln_pre = (params["ln_pre_g"], params["ln_pre_b"]) if li == 0 else None
        h = transformer_layer(h, lyr, heads=heads, s_real=S, ln_pre=ln_pre)

    # --- CLS token -> fused ln_post + visual projection + classifier fc ---
    cls_out = h[:, 0, :]                                                 # (B, width) bf16
    logits_pad = clip_head(cls_out, params["ln_post_g"], params["ln_post_b"],
                           params["vis_proj"], params["fc_w_pad"],
                           params["fc_b_pad"])                           # (B, 128) bf16
    return logits_pad[:, :params["num_classes"]]                         # (B, nc) bf16


# ----------------------------------- main -------------------------------------

if __name__ == "__main__":
    key = jax.random.PRNGKey(0)
    k_param, k_x = jax.random.split(key)

    B, C, IMG = 2, 3, 32
    NUM_CLASSES = 10
    params = init_params(k_param, C=C, image=IMG, patch=16, width=64, layers=2,
                         heads=4, output_dim=1024, num_classes=NUM_CLASSES)

    x = jax.random.normal(k_x, (B, C, IMG, IMG), jnp.float32)   # NCHW like PyTorch

    logits = clip_vision_forward(params, x)
    logits = jax.block_until_ready(logits)

    assert logits.shape == (B, NUM_CLASSES)
    assert logits.dtype == jnp.bfloat16
    print("KERNEL_OK")
</pallas_src>

<mosaic_0001>
module attributes {stable_mosaic.version = 11 : i64} {
  func.func @_matmul_kernel(%arg0: i32, %arg1: i32, %arg2: i32, %arg3: memref<8x256xbf16, #tpu.memory_space<vmem>>, %arg4: memref<256x64xbf16, #tpu.memory_space<vmem>>, %arg5: memref<8x64xf32, #tpu.memory_space<vmem>>) attributes {dimension_semantics = [#tpu.dimension_semantics<parallel>, #tpu.dimension_semantics<parallel>, #tpu.dimension_semantics<arbitrary>], iteration_bounds = array<i64: 1, 1, 3>, scalar_prefetch = 0 : i64, scratch_operands = 0 : i64, tpu.core_type = #tpu.core_type<tc>, window_params = [{transform_indices = @transform_0, window_bounds = array<i64: 8, 256>}, {transform_indices = @transform_1, window_bounds = array<i64: 256, 64>}, {transform_indices = @transform_2, window_bounds = array<i64: 8, 64>}]} {
    %c0_i32 = arith.constant 0 : i32
    %0 = arith.cmpi eq, %arg2, %c0_i32 : i32
    %1 = arith.extui %0 : i1 to i32
    %c0_i32_0 = arith.constant 0 : i32
    %2 = arith.cmpi ne, %1, %c0_i32_0 : i32
    scf.if %2 {
      %cst_8 = arith.constant 0.000000e+00 : f32
      %9 = vector.broadcast %cst_8 : f32 to vector<8x64xf32>
      %c0_9 = arith.constant 0 : index
      %c0_10 = arith.constant 0 : index
      %10 = vector.load %arg5[%c0_9, %c0_10] : memref<8x64xf32, #tpu.memory_space<vmem>>, vector<8x64xf32>
      tpu.vector_store %arg5[%c0_9, %c0_10], %9 {strides = array<i32>} : memref<8x64xf32, #tpu.memory_space<vmem>>, vector<8x64xf32>,
    } else {
    }
    %c0 = arith.constant 0 : index
    %c0_1 = arith.constant 0 : index
    %3 = vector.load %arg5[%c0, %c0_1] : memref<8x64xf32, #tpu.memory_space<vmem>>, vector<8x64xf32>
    %c0_2 = arith.constant 0 : index
    %c0_3 = arith.constant 0 : index
    %4 = vector.load %arg3[%c0_2, %c0_3] : memref<8x256xbf16, #tpu.memory_space<vmem>>, vector<8x256xbf16>
    %c0_4 = arith.constant 0 : index
    %c0_5 = arith.constant 0 : index
    %5 = vector.load %arg4[%c0_4, %c0_5] : memref<256x64xbf16, #tpu.memory_space<vmem>>, vector<256x64xbf16>
    %cst = arith.constant dense<0.000000e+00> : vector<8x64xf32>
    %6 = tpu.matmul %4, %5, %cst {dimension_numbers = #tpu.dot_dimension_numbers<[1], [0], [0], [1], [0, 0, 1, 1], [], []>} : vector<8x256xbf16>, vector<256x64xbf16>, vector<8x64xf32> -> vector<8x64xf32>
    %7 = arith.addf %3, %6 : vector<8x64xf32>
    %c0_6 = arith.constant 0 : index
    %c0_7 = arith.constant 0 : index
    %8 = vector.load %arg5[%c0_6, %c0_7] : memref<8x64xf32, #tpu.memory_space<vmem>>, vector<8x64xf32>
    tpu.vector_store %arg5[%c0_6, %c0_7], %7 {strides = array<i32>} : memref<8x64xf32, #tpu.memory_space<vmem>>, vector<8x64xf32>,
    return
  }
  func.func @transform_0(%arg0: i32, %arg1: i32, %arg2: i32) -> (i32, i32) {
    %c0_i32 = arith.constant 0 : i32
    return %arg0, %arg2 : i32, i32
  }
  func.func @transform_1(%arg0: i32, %arg1: i32, %arg2: i32) -> (i32, i32) {
    %c0_i32 = arith.constant 0 : i32
    return %arg2, %arg1 : i32, i32
  }
  func.func @transform_2(%arg0: i32, %arg1: i32, %arg2: i32) -> (i32, i32) {
    %c0_i32 = arith.constant 0 : i32
    return %arg0, %arg1 : i32, i32
  }
}

</mosaic_0001>

<llo_original>
// kernel: tpu_custom_call.1
$region0: #{tpu_custom_call.1}
  #allocation0 [shape = 'u32[]', space=smem, size = 0x4, offset = 0x4, fixed_abs, tag = 'smem constant byte address 0x4 - core index']
  #allocation1 [shape = 'u32[144,128]{1,0:T(1,128)}', space=vmem, size = 0x12000, scoped, tag = 'internal scratch']
  %s0 = inlined_call_operand.vmem [shape: bf16[8,768], index: 0, kind: input, shape index: {}]
  %s1 = inlined_call_operand.vmem [shape: bf16[768,64], index: 1, kind: input, shape index: {}]
  %s2 = inlined_call_operand.hbm [shape: f32[8,64], index: 2, kind: output, shape index: {}]
  %s3 = sld [smem:[#allocation0]]
  $region45: #{tpu_custom_call.1} parent=0
    _
  %s5 = ssub.s32 1, %s3
  %s6 = scalar_select 0, %s5, %s3
  $region1: #{tpu_custom_call.1} parent=0
    #allocation2 [shape = 'u8[4096]{0}', space=vmem, size = 0x1000, scoped, tag = 'output window, operand 0, single buffered']
    #allocation3 [shape = 's32[2]{0}', space=sflag, size = 0x8, scoped, tag = 'scoped memory for tpu_custom_call.1']
    %7 = vsyncpa [#allocation3], 0
    loop: start=0, step=1, limit=5
    $region2: #{tpu_custom_call.1} parent=1 // loop_pre_header
      _
    $region3: #{tpu_custom_call.1} parent=1 // loop_header
      %s9 = sphi 0, %s13
      %p10 = scmp.ge.s32.totalorder %s9, 5
      %s16 = sphi 0, %s35
      %s17 = sphi 0, %s31
      %s18 = sphi 0, %s27
      %s19 = sphi 0, %s16
      %s20 = sphi 0, %s17
      %s21 = sphi 0, %s18
      %s22 = sphi 0, %s19
      %s23 = sphi 0, %s20
      %s24 = sphi 0, %s21
      %s40 = sphi 0, %s42
      %s43 = sphi 0, %s40
      %s44 = sphi 0, %s43
      %s60 = sphi 0, %s44
      %s68 = sphi 0, %s70
      %s71 = sphi 0, %s68
      %s72 = sphi 0, %s71
      %s88 = sphi 0, %s72
      %s96 = sphi 0, %s98
      %s99 = sphi 0, %s96
      %s100 = sphi 0, %s99
      %s116 = sphi 0, %s100
    $region4: #{tpu_custom_call.1} parent=1 // loop_header_branch
      %12 = sbr.rel (%p10) target = $region8
    $region5: #{tpu_custom_call.1} parent=1 // loop_body
      %s14 = ssub.s32 %s9, 1
      %s15 = ssub.s32 %s9, 2
      %s25 = sadd.s32 1, %s18
      %p26 = scmp.ge.s32.totalorder %s25, 3
      %s27 = scalar_select %p26, 0, %s25
      %s28 = sadd.s32 1, %s17
      %s29 = scalar_select %p26, %s28, %s17
      %p30 = scmp.ge.s32.totalorder %s29, 1
      %s31 = scalar_select %p30, 0, %s29
      %s32 = sadd.s32 1, %s16
      %s33 = scalar_select %p30, %s32, %s16
      %p34 = scmp.ge.s32.totalorder %s33, 1
      %s35 = scalar_select %p34, 0, %s33
      %s36 = ssub.s32 %s16, %s35
      %s37 = ssub.s32 %s18, %s27
      %s38 = sor.u32 %s36, %s37
      %p39 = scmp.eq.s32.totalorder %s38, 0
      %s41 = sadd.s32 %s40, 1
      %s42 = scalar_select %p39, %s40, %s41
      %p45 = pneg %p39
      %p46 = scmp.eq.s32.totalorder %s9, 2
      %p47 = por %p45, %p46
      %p48 = scmp.ne.s32.totalorder %s40, %s43
      %p49 = scmp.eq.s32.totalorder %s9, 0
      %p50 = por %p48, %p49
      %p51 = scmp.ne.s32.totalorder %s40, %s43
      %p52 = scmp.eq.s32.totalorder %s14, 2
      %p53 = por %p51, %p52
      %p54 = scmp.ne.s32.totalorder %s43, %s44
      %p55 = scmp.eq.s32.totalorder %s14, 0
      %p56 = por %p54, %p55
      %p57 = scmp.ne.s32.totalorder %s43, %s44
      %p58 = scmp.eq.s32.totalorder %s15, 2
      %p59 = por %p57, %p58
      %p61 = scmp.ne.s32.totalorder %s44, %s60
      %p62 = scmp.eq.s32.totalorder %s15, 0
      %p63 = por %p61, %p62
      %s64 = ssub.s32 %s18, %s27
      %s65 = ssub.s32 %s17, %s31
      %s66 = sor.u32 %s64, %s65
      %p67 = scmp.eq.s32.totalorder %s66, 0
      %s69 = sadd.s32 %s68, 1
      %s70 = scalar_select %p67, %s68, %s69
      %p73 = pneg %p67
      %p74 = scmp.eq.s32.totalorder %s9, 2
      %p75 = por %p73, %p74
      %p76 = scmp.ne.s32.totalorder %s68, %s71
      %p77 = scmp.eq.s32.totalorder %s9, 0
      %p78 = por %p76, %p77
      %p79 = scmp.ne.s32.totalorder %s68, %s71
      %p80 = scmp.eq.s32.totalorder %s14, 2
      %p81 = por %p79, %p80
      %p82 = scmp.ne.s32.totalorder %s71, %s72
      %p83 = scmp.eq.s32.totalorder %s14, 0
      %p84 = por %p82, %p83
      %p85 = scmp.ne.s32.totalorder %s71, %s72
      %p86 = scmp.eq.s32.totalorder %s15, 2
      %p87 = por %p85, %p86
      %p89 = scmp.ne.s32.totalorder %s72, %s88
      %p90 = scmp.eq.s32.totalorder %s15, 0
      %p91 = por %p89, %p90
      %s92 = ssub.s32 %s16, %s35
      %s93 = ssub.s32 %s17, %s31
      %s94 = sor.u32 %s92, %s93
      %p95 = scmp.eq.s32.totalorder %s94, 0
      %s97 = sadd.s32 %s96, 1
      %s98 = scalar_select %p95, %s96, %s97
      %p101 = pneg %p95
      %p102 = scmp.eq.s32.totalorder %s9, 2
      %p103 = por %p101, %p102
      %p104 = scmp.ne.s32.totalorder %s96, %s99
      %p105 = scmp.eq.s32.totalorder %s9, 0
      %p106 = por %p104, %p105
      %p107 = scmp.ne.s32.totalorder %s96, %s99
      %p108 = scmp.eq.s32.totalorder %s14, 2
      %p109 = por %p107, %p108
      %p110 = scmp.ne.s32.totalorder %s99, %s100
      %p111 = scmp.eq.s32.totalorder %s14, 0
      %p112 = por %p110, %p111
      %p113 = scmp.ne.s32.totalorder %s99, %s100
      %p114 = scmp.eq.s32.totalorder %s15, 2
      %p115 = por %p113, %p114
      %p117 = scmp.ne.s32.totalorder %s100, %s116
      %p118 = scmp.eq.s32.totalorder %s15, 0
      %p119 = por %p117, %p118
      %p120 = scmp.le.s32.totalorder 1, %s9
      %p121 = scmp.lt.s32.totalorder %s9, 4
      %p122 = pnand %p120, %p121
      %p123 = pneg %p122
      // Predicated region
      $region9: #{tpu_custom_call.1} parent=5 // pred_check
        _
      $region10: #{tpu_custom_call.1} parent=5 // pred_check_branch
        %125 = sbr.rel (%p122) target = $region12
      $region11: #{tpu_custom_call.1} parent=5 // pred_region
        %s126 = ssub.s32 %s9, 1
      $region12: #{tpu_custom_call.1} parent=5 // pred_fallthru
        _
      %p127 = scmp.lt.s32.totalorder %s9, 3
      // Predicated region
      $region13: #{tpu_custom_call.1} parent=5 // pred_check
        %p128 = pneg %p127
      $region14: #{tpu_custom_call.1} parent=5 // pred_check_branch
        %130 = sbr.rel (%p128) target = $region16
      $region15: #{tpu_custom_call.1} parent=5 // pred_region
        // Predicated region
        $region17: #{tpu_custom_call.1} parent=15 // pred_check
          %p131 = pneg %p50
        $region18: #{tpu_custom_call.1} parent=15 // pred_check_branch
          %133 = sbr.rel (%p131) target = $region20
        $region19: #{tpu_custom_call.1} parent=15 // pred_region
          %s134 = smul.u32 2, %s18
          %p135 = scmp.lt.s32.totalorder %s16, 0
          %s136 = scalar_select %p135, %s16, 0
          %p137 = scmp.lt.s32.totalorder %s134, 5
          %s138 = scalar_select %p137, %s134, 5
          %s139 = smul.addr %s136, 6
          %s140 = sadd.s32 %s138, %s139
          %s141 = smul.addr %s140, 4
          %s142 = scalar_lea.vmem %s0, %s141
          %s143 = smul.u32 2, %s18
        $region20: #{tpu_custom_call.1} parent=15 // pred_fallthru
          _
        // Predicated region
        $region21: #{tpu_custom_call.1} parent=15 // pred_check
          %p144 = pneg %p78
        $region22: #{tpu_custom_call.1} parent=15 // pred_check_branch
          %146 = sbr.rel (%p144) target = $region24
        $region23: #{tpu_custom_call.1} parent=15 // pred_region
          %s147 = smul.u32 32, %s18
          %p148 = scmp.lt.s32.totalorder %s147, 95
          %s149 = scalar_select %p148, %s147, 95
          %p150 = scmp.lt.s32.totalorder %s17, 0
          %s151 = scalar_select %p150, %s17, 0
          %s152 = sadd.s32 %s151, %s149
          %s153 = smul.addr %s152, 4
          %s154 = scalar_lea.vmem %s1, %s153
          %s155 = smul.u32 32, %s18
        $region24: #{tpu_custom_call.1} parent=15 // pred_fallthru
          _
      $region16: #{tpu_custom_call.1} parent=5 // pred_fallthru
        _
      %p156 = scmp.le.s32.totalorder 1, %s9
      %p157 = scmp.lt.s32.totalorder %s9, 4
      %p158 = pnand %p156, %p157
      %p159 = pneg %p158
      // Predicated region
      $region25: #{tpu_custom_call.1} parent=5 // pred_check
        _
      $region26: #{tpu_custom_call.1} parent=5 // pred_check_branch
        %161 = sbr.rel (%p158) target = $region28
      $region27: #{tpu_custom_call.1} parent=5 // pred_region
        %s162 = ssub.s32 %s9, 1
        %s163 = smul.u32 2, %s21
        %p164 = scmp.lt.s32.totalorder %s19, 0
        %s165 = scalar_select %p164, %s19, 0
        %p166 = scmp.lt.s32.totalorder %s163, 5
        %s167 = scalar_select %p166, %s163, 5
        %s168 = smul.addr %s165, 6
        %s169 = sadd.s32 %s167, %s168
        %s170 = smul.addr %s169, 4
        %s171 = scalar_lea.vmem %s0, %s170
        %p172 = pneg %p56
        %p173 = pneg %p53
        %s174 = smul.u32 32, %s21
        %p175 = scmp.lt.s32.totalorder %s174, 95
        %s176 = scalar_select %p175, %s174, 95
        %p177 = scmp.lt.s32.totalorder %s20, 0
        %s178 = scalar_select %p177, %s20, 0
        %s179 = sadd.s32 %s178, %s176
        %s180 = smul.addr %s179, 4
        %s181 = scalar_lea.vmem %s1, %s180
        %p182 = pneg %p84
        %p183 = pneg %p81
        %p184 = pneg %p112
        %p185 = pneg %p109
        %s186 = smul.u32 2, %s21
        %p187 = scmp.lt.s32.totalorder %s19, 0
        %s188 = scalar_select %p187, %s19, 0
        %p189 = scmp.lt.s32.totalorder %s186, 5
        %s190 = scalar_select %p189, %s186, 5
        %s191 = smul.addr %s188, 6
        %s192 = sadd.s32 %s190, %s191
        %s193 = smul.addr %s192, 4
        %s194 = scalar_lea.vmem %s0, %s193
        %s195 = smul.u32 2, %s21
        %s196 = smul.u32 32, %s21
        %p197 = scmp.lt.s32.totalorder %s196, 95
        %s198 = scalar_select %p197, %s196, 95
        %p199 = scmp.lt.s32.totalorder %s20, 0
        %s200 = scalar_select %p199, %s20, 0
        %s201 = sadd.s32 %s200, %s198
        %s202 = smul.addr %s201, 4
        %s203 = scalar_lea.vmem %s1, %s202
        %s204 = smul.u32 32, %s21
        %p206 = scmp.eq.s32.totalorder %s21, 0
        // Predicated region
        $region29: #{tpu_custom_call.1} parent=27 // pred_check
          %p207 = pneg %p206
        $region30: #{tpu_custom_call.1} parent=27 // pred_check_branch
          %209 = sbr.rel (%p207) target = $region32
        $region31: #{tpu_custom_call.1} parent=27 // pred_region
          %vm210 = vcmask 523264
          %211 = vst.msk [vmem:[#allocation2] sm:$0xff] %vm210, 0.0
        $region32: #{tpu_custom_call.1} parent=27 // pred_fallthru
          _
        %v212 = vld [vmem:[#allocation2] sm:$0xff]
        %v213 = vld [vmem:[%s194] sm:$0xff]
        %v214 = vld [vmem:[%s203] sm:$0xf]
        %v215 = vld [vmem:[%s203 + $0x4] sm:$0xf]
        %v216 = vld [vmem:[%s203 + $0x8] sm:$0xf]
        %v217 = vld [vmem:[%s203 + $0xc] sm:$0xf]
        %v218 = vld [vmem:[%s203 + $0x10] sm:$0xf]
        %v219 = vld [vmem:[%s203 + $0x14] sm:$0xf]
        %v220 = vld [vmem:[%s203 + $0x18] sm:$0xf]
        %v221 = vld [vmem:[%s203 + $0x1c] sm:$0xf]
        %v222 = vld [vmem:[%s203 + $0x20] sm:$0xf]
        %v223 = vld [vmem:[%s203 + $0x24] sm:$0xf]
        %v224 = vld [vmem:[%s203 + $0x28] sm:$0xf]
        %v225 = vld [vmem:[%s203 + $0x2c] sm:$0xf]
        %v226 = vld [vmem:[%s203 + $0x30] sm:$0xf]
        %v227 = vld [vmem:[%s203 + $0x34] sm:$0xf]
        %v228 = vld [vmem:[%s203 + $0x38] sm:$0xf]
        %v229 = vld [vmem:[%s203 + $0x3c] sm:$0xf]
        %v230 = vld [vmem:[%s203 + $0x40] sm:$0xf]
        %v231 = vld [vmem:[%s203 + $0x44] sm:$0xf]
        %v232 = vld [vmem:[%s203 + $0x48] sm:$0xf]
        %v233 = vld [vmem:[%s203 + $0x4c] sm:$0xf]
        %v234 = vld [vmem:[%s203 + $0x50] sm:$0xf]
        %v235 = vld [vmem:[%s203 + $0x54] sm:$0xf]
        %v236 = vld [vmem:[%s203 + $0x58] sm:$0xf]
        %v237 = vld [vmem:[%s203 + $0x5c] sm:$0xf]
        %v238 = vld [vmem:[%s203 + $0x60] sm:$0xf]
        %v239 = vld [vmem:[%s203 + $0x64] sm:$0xf]
        %v240 = vld [vmem:[%s203 + $0x68] sm:$0xf]
        %v241 = vld [vmem:[%s203 + $0x6c] sm:$0xf]
        %v242 = vld [vmem:[%s203 + $0x70] sm:$0xf]
        %v243 = vld [vmem:[%s203 + $0x74] sm:$0xf]
        %v244 = vld [vmem:[%s203 + $0x78] sm:$0xf]
        %v245 = vld [vmem:[%s203 + $0x7c] sm:$0xf]
        %v247 = vunpack.c.l.b16 %v213
        %v248 = vunpack.c.h.b16 %v213
        %v249 = vpack.c.b16 %v247, %v247
        %v250 = vpack.c.b16 %v248, %v248
        %v285 = vunpack.c.l.b16 %v214
        %v286 = vunpack.c.l.b16 %v215
        %v287 = vunpack.c.l.b16 %v216
        %v288 = vunpack.c.l.b16 %v217
        %v289 = vunpack.c.l.b16 %v218
        %v290 = vunpack.c.l.b16 %v219
        %v291 = vunpack.c.l.b16 %v220
        %v292 = vunpack.c.l.b16 %v221
        %v293 = vunpack.c.l.b16 %v222
        %v294 = vunpack.c.l.b16 %v223
        %v295 = vunpack.c.l.b16 %v224
        %v296 = vunpack.c.l.b16 %v225
        %v297 = vunpack.c.l.b16 %v226
        %v298 = vunpack.c.l.b16 %v227
        %v299 = vunpack.c.l.b16 %v228
        %v300 = vunpack.c.l.b16 %v229
        %v301 = vunpack.c.l.b16 %v230
        %v302 = vunpack.c.l.b16 %v231
        %v303 = vunpack.c.l.b16 %v232
        %v304 = vunpack.c.l.b16 %v233
        %v305 = vunpack.c.l.b16 %v234
        %v306 = vunpack.c.l.b16 %v235
        %v307 = vunpack.c.l.b16 %v236
        %v308 = vunpack.c.l.b16 %v237
        %v309 = vunpack.c.l.b16 %v238
        %v310 = vunpack.c.l.b16 %v239
        %v311 = vunpack.c.l.b16 %v240
        %v312 = vunpack.c.l.b16 %v241
        %v313 = vunpack.c.l.b16 %v242
        %v314 = vunpack.c.l.b16 %v243
        %v315 = vunpack.c.l.b16 %v244
        %v316 = vunpack.c.l.b16 %v245
        %v317 = vpack.c.b16 %v286, %v285
        %v318 = vpack.c.b16 %v288, %v287
        %v319 = vpack.c.b16 %v290, %v289
        %v320 = vpack.c.b16 %v292, %v291
        %v321 = vpack.c.b16 %v294, %v293
        %v322 = vpack.c.b16 %v296, %v295
        %v323 = vpack.c.b16 %v298, %v297
        %v324 = vpack.c.b16 %v300, %v299
        %v325 = vpack.c.b16 %v302, %v301
        %v326 = vpack.c.b16 %v304, %v303
        %v327 = vpack.c.b16 %v306, %v305
        %v328 = vpack.c.b16 %v308, %v307
        %v329 = vpack.c.b16 %v310, %v309
        %v330 = vpack.c.b16 %v312, %v311
        %v331 = vpack.c.b16 %v314, %v313
        %v332 = vpack.c.b16 %v316, %v315
        %349 = vmatprep.subr.bf16.mxu0 0
        %350 = vmatpush1.bf16.msra.mxu0 %v317
        %351 = vmatprep.subr.bf16.mxu0 0
        %352 = vmatpush1.bf16.msra.mxu0 %v318
        %353 = vmatprep.subr.bf16.mxu0 0
        %354 = vmatpush1.bf16.msra.mxu0 %v319
        %355 = vmatprep.subr.bf16.mxu0 0
        %356 = vmatpush1.bf16.msra.mxu0 %v320
        %357 = vmatprep.subr.bf16.mxu0 0
        %358 = vmatpush1.bf16.msra.mxu0 %v321
        %359 = vmatprep.subr.bf16.mxu0 0
        %360 = vmatpush1.bf16.msra.mxu0 %v322
        %361 = vmatprep.subr.bf16.mxu0 0
        %362 = vmatpush1.bf16.msra.mxu0 %v323
        %363 = vmatprep.subr.bf16.mxu0 0
        %364 = vmatpush1.bf16.msra.mxu0 %v324
        %365 = vmatprep.subr.bf16.mxu0 0
        %366 = vmatpush1.bf16.msra.mxu0 %v325
        %367 = vmatprep.subr.bf16.mxu0 0
        %368 = vmatpush1.bf16.msra.mxu0 %v326
        %369 = vmatprep.subr.bf16.mxu0 0
        %370 = vmatpush1.bf16.msra.mxu0 %v327
        %371 = vmatprep.subr.bf16.mxu0 0
        %372 = vmatpush1.bf16.msra.mxu0 %v328
        %373 = vmatprep.subr.bf16.mxu0 0
        %374 = vmatpush1.bf16.msra.mxu0 %v329
        %375 = vmatprep.subr.bf16.mxu0 0
        %376 = vmatpush1.bf16.msra.mxu0 %v330
        %377 = vmatprep.subr.bf16.mxu0 0
        %378 = vmatpush1.bf16.msra.mxu0 %v331
        %379 = vmatprep.subr.bf16.mxu0 0
        %380 = vmatpush1.bf16.msra.mxu0 %v332
        %381 = vmatprep.mubr.bf16.mxu0 %v250
        %382 = vmatmul.mubr.bf16.gmra.mrb[0].mxu0 %v249
        %v383 = vpop.f32.mrb[0].mxu0
        %v384 = vadd.f32 0.0, %v383
        %v385 = vpop.f32.mrb[0].mxu0
        %v386 = vpop.f32.mrb[0].mxu0
        %v387 = vpop.f32.mrb[0].mxu0
        %388 = vdwg.mxu0
        %v389 = vadd.f32 %v212, %v384
        %vm390 = vcmask 523264
        %391 = vst.msk [vmem:[#allocation2] sm:$0xff] %vm390, %v389
        // Predicated region
        $region33: #{tpu_custom_call.1} parent=27 // pred_check
          %p392 = pneg %p109
        $region34: #{tpu_custom_call.1} parent=27 // pred_check_branch
          %394 = sbr.rel (%p392) target = $region36
        $region35: #{tpu_custom_call.1} parent=27 // pred_region
          %s396 = ssub.s32 128, 128
          %397 = vsyncadd [#allocation3], %s396
          %s398 = sadd.s32 %s20, %s19
          %s399 = smul.addr %s398, 128
          %s400 = scalar_lea.hbm %s2, %s399
          %s402 = sshll.u32 [#allocation2], 4
          %s403 = int_to_ptr.vmem [resolvable:$true] %s402
          %405 = dma.vmem_to_hbm [thread:$0]  %s403, 128, %s400, [#allocation3]
        $region36: #{tpu_custom_call.1} parent=27 // pred_fallthru
          _
        // Predicated region
        $region37: #{tpu_custom_call.1} parent=27 // pred_check
          %p406 = pneg %p109
        $region38: #{tpu_custom_call.1} parent=27 // pred_check_branch
          %408 = sbr.rel (%p406) target = $region40
        $region39: #{tpu_custom_call.1} parent=27 // pred_region
          %409 = dma.done [#allocation3], 128
        $region40: #{tpu_custom_call.1} parent=27 // pred_fallthru
          _
      $region28: #{tpu_custom_call.1} parent=5 // pred_fallthru
        _
      %p410 = scmp.le.s32.totalorder 2, %s9
      // Predicated region
      $region41: #{tpu_custom_call.1} parent=5 // pred_check
        %p411 = pneg %p410
      $region42: #{tpu_custom_call.1} parent=5 // pred_check_branch
        %413 = sbr.rel (%p411) target = $region44
      $region43: #{tpu_custom_call.1} parent=5 // pred_region
        %s414 = ssub.s32 %s9, 2
      $region44: #{tpu_custom_call.1} parent=5 // pred_fallthru
        _
    $region6: #{tpu_custom_call.1} parent=1 // loop_footer
      %s13 = sadd.s32 1, %s9
    $region7: #{tpu_custom_call.1} parent=1 // loop_footer_branch
      %8 = sbr.rel target = $region3
    $region8: #{tpu_custom_call.1} parent=1 // loop_exit
      _
    %415 = vsyncpa [#allocation3], 1
    %s416 = scalar_lea.sflag [#allocation3], 1
    %417 = vsyncpa %s416, 1

</llo_original>
